<compile_context>
chip_gen: v5e
topology: v5e:2x2
jax: 0.10.0
libtpu: 0.0.40
codegen_flags: <defaults>
</compile_context>

<pallas_src>
import math

import jax
import jax.numpy as jnp
from jax.experimental import pallas as pl
from jax.experimental.pallas import tpu as pltpu


_SQRT_2PI = math.sqrt(2.0 * math.pi)
_LANES = 512  # lane-dense last dim (multiple of 128 -> unmasked vst)


def _round_up(v: int, m: int) -> int:
    return ((v + m - 1) // m) * m


def _block_config():
    """(bytes per input block, vmem_limit_bytes) tuned per TPU generation."""
    try:
        kind = jax.devices()[0].device_kind.lower()
    except Exception:  # pragma: no cover - defensive
        kind = ""
    if "7" in kind:
        # v7x: 3.2 TB/s HBM -> bigger blocks amortize the ~0.35us/step cost.
        # 4 MiB blocks -> 4 double-buffered buffers = 16 MiB < 32 MiB limit.
        return 4 << 20, 32 << 20
    # v5e / v6e: 2 MiB blocks sit on the measured roofline plateau; 8 MiB of
    # buffers is safe even under v5e's 16 MiB default, but set 32 MiB anyway.
    return 2 << 20, 32 << 20


# ---------------------------------------------------------------------------
# Kernel: elementwise Gaussian PDF on a (tm, _LANES) tile.
#   params = (mu, a, inv_norm) with a = -0.5/sigma^2, inv_norm = 1/(sigma*sqrt(2pi))
#   o = inv_norm * exp(a * (x - mu)^2)
# ---------------------------------------------------------------------------
def _gaussian_pdf_kernel(params_ref, x_ref, o_ref):
    mu = params_ref[0]        # scalar reads from SMEM
    a = params_ref[1]
    inv_norm = params_ref[2]
    # f32 compute everywhere: correct on v5e (no bf16 VPU/EUP) and keeps the
    # numerics identical to the reference; op is HBM-bound so this is free.
    d = x_ref[...].astype(jnp.float32) - mu
    o_ref[...] = (inv_norm * jnp.exp(a * d * d)).astype(o_ref.dtype)


def _gaussian_pdf_jnp(x, mu, a, inv_norm):
    """Fused pure-jnp path (tiny inputs / unaligned tail)."""
    xf = x.astype(jnp.float32)
    d = xf - mu
    return (inv_norm * jnp.exp(a * d * d)).astype(x.dtype)


def _theta_forward_pallas_2d(xf_aligned, params, out_dtype):
    """Run the kernel on a flat, _LANES-aligned slab.  Returns a flat array."""
    n = xf_aligned.shape[0]                       # divisible by _LANES
    itemsize = jnp.dtype(xf_aligned.dtype).itemsize
    rows = n // _LANES
    x2d = xf_aligned.reshape(rows, _LANES)        # contiguous view, no copy

    # Sublane granularity for the second-to-last block dim (packed dtypes
    # need 16/32-row granularity).
    sub = 8 * max(1, 4 // itemsize)

    block_bytes, vmem_limit = _block_config()
    tm_max = max(sub, ((block_bytes // (_LANES * itemsize)) // sub) * sub)

    if rows <= sub:
        tm = rows                                 # full-array block
    else:
        # At least 2 blocks so the "parallel" grid axis can shard across both
        # v7x TensorCores; cap at the generation-tuned maximum block size.
        tm = min(tm_max, _round_up(pl.cdiv(rows, 2), sub))
    grid = (pl.cdiv(rows, tm),)                   # partial last block is masked

    cost = pl.CostEstimate(
        flops=4 * n,
        transcendentals=n,
        bytes_accessed=2 * n * itemsize,
    )

    out2d = pl.pallas_call(
        _gaussian_pdf_kernel,
        out_shape=jax.ShapeDtypeStruct((rows, _LANES), out_dtype),
        grid=grid,
        in_specs=[
            pl.BlockSpec(memory_space=pltpu.MemorySpace.SMEM),   # params (3,)
            pl.BlockSpec((tm, _LANES), lambda i: (i, 0)),        # x tile
        ],
        out_specs=pl.BlockSpec((tm, _LANES), lambda i: (i, 0)),  # out tile
        compiler_params=pltpu.CompilerParams(
            dimension_semantics=("parallel",),    # megacore sharding on v7x
            vmem_limit_bytes=vmem_limit,
        ),
        cost_estimate=cost,
    )(params, x2d)

    return out2d.reshape(-1)


# ---------------------------------------------------------------------------
# Wrapper: shape glue in plain JAX, hot path in the Pallas kernel.
# ---------------------------------------------------------------------------
def theta_forward(x: jax.Array, theta: jax.Array, *, min_pallas_elems: int = 65536) -> jax.Array:
    """Elementwise Gaussian PDF, matching Theta.forward semantics."""
    orig_shape = x.shape
    orig_dtype = x.dtype

    theta_f32 = theta.astype(jnp.float32)
    mu = theta_f32[0]
    sigma = theta_f32[1]
    inv_norm = 1.0 / (sigma * _SQRT_2PI)
    a = -0.5 / (sigma * sigma)

    n = int(x.size)

    # Tiny inputs: a single fused XLA elementwise op beats the kernel's fixed
    # launch + pipeline-prologue cost.
    if n < min_pallas_elems:
        return _gaussian_pdf_jnp(x, mu, a, inv_norm)

    xf = x.reshape(-1)                            # flat contiguous view
    n_pre = (n // _LANES) * _LANES                # lane-aligned prefix length
    if n_pre == 0:
        return _gaussian_pdf_jnp(x, mu, a, inv_norm)

    params = jnp.stack([mu, a, inv_norm]).astype(jnp.float32)

    if n_pre == n:
        # Aligned: zero extra HBM passes around the kernel.
        out_flat = _theta_forward_pallas_2d(xf, params, orig_dtype)
        return out_flat.reshape(orig_shape)

    # Misaligned: aligned prefix through the kernel, (< _LANES)-element tail
    # through the fused jnp path, stitched back together.
    out_pre = _theta_forward_pallas_2d(xf[:n_pre], params, orig_dtype)
    out_tail = _gaussian_pdf_jnp(xf[n_pre:], mu, a, inv_norm)
    return jnp.concatenate([out_pre, out_tail]).reshape(orig_shape)


def theta_forward_ref(x, theta):
    """Pure-JAX reference (mirrors the PyTorch forward exactly)."""
    mu, sigma = theta[0], theta[1]
    xf = x.astype(jnp.float32)
    return (1.0 / (sigma * _SQRT_2PI)
            * jnp.exp(-0.5 * ((xf - mu) / sigma) ** 2)).astype(x.dtype)


# TODO(synk): Theta.sample() (torch.distributions.Normal sampling) is not part
# of the forward pass and is intentionally not implemented as a kernel.

if __name__ == "__main__":
    # Deterministic parameters, same as nn.Parameter(torch.tensor([-10., 100.]))
    theta = jnp.array([-10.0, 100.0], dtype=jnp.float32)

    key = jax.random.PRNGKey(0)
    k0, k1, k2 = jax.random.split(key, 3)

    # Samples-like input [n, 1]; n = 2048 is lane-aligned so the forced
    # kernel path runs with zero wrapper-side copies.
    x = jax.random.normal(k0, (2048, 1), dtype=jnp.float32) * 100.0 - 10.0
    out_kernel = jax.block_until_ready(theta_forward(x, theta, min_pallas_elems=0))
    ref = theta_forward_ref(x, theta)
    assert out_kernel.shape == x.shape and out_kernel.dtype == x.dtype
    assert jnp.allclose(out_kernel, ref, rtol=1e-5, atol=1e-8), "kernel mismatch vs reference"

    # Misaligned size exercises the aligned-prefix kernel + jnp-tail path.
    x_mis = jax.random.normal(k1, (1000, 1), dtype=jnp.float32) * 50.0 - 10.0
    out_mis = jax.block_until_ready(theta_forward(x_mis, theta, min_pallas_elems=0))
    assert jnp.allclose(out_mis, theta_forward_ref(x_mis, theta), rtol=1e-5, atol=1e-8), \
        "misaligned-path mismatch vs reference"

    # Default dispatch on a tiny input uses the fused pure-jnp path.
    x_small = jax.random.normal(k2, (16, 1), dtype=jnp.float32)
    out_small = jax.block_until_ready(theta_forward(x_small, theta))
    assert jnp.allclose(out_small, theta_forward_ref(x_small, theta), rtol=1e-5, atol=1e-8), \
        "small-path mismatch vs reference"

    print("KERNEL_OK")
</pallas_src>

<mosaic_0001>
module attributes {stable_mosaic.version = 11 : i64} {
  func.func @_gaussian_pdf_kernel(%arg0: i32, %arg1: memref<3xf32, #tpu.memory_space<smem>>, %arg2: memref<4x512xf32, #tpu.memory_space<vmem>>, %arg3: memref<4x512xf32, #tpu.memory_space<vmem>>) attributes {dimension_semantics = [#tpu.dimension_semantics<parallel>], iteration_bounds = array<i64: 1>, scalar_prefetch = 0 : i64, scratch_operands = 0 : i64, tpu.core_type = #tpu.core_type<tc>, window_params = [{transform_indices = @transform_0, window_bounds = array<i64: 3>}, {transform_indices = @transform_1, window_bounds = array<i64: 4, 512>}, {transform_indices = @transform_2, window_bounds = array<i64: 4, 512>}]} {
    %c0 = arith.constant 0 : index
    %0 = memref.load %arg1[%c0] : memref<3xf32, #tpu.memory_space<smem>>
    %c1 = arith.constant 1 : index
    %1 = memref.load %arg1[%c1] : memref<3xf32, #tpu.memory_space<smem>>
    %c2 = arith.constant 2 : index
    %2 = memref.load %arg1[%c2] : memref<3xf32, #tpu.memory_space<smem>>
    %c0_0 = arith.constant 0 : index
    %c0_1 = arith.constant 0 : index
    %3 = vector.load %arg2[%c0_0, %c0_1] : memref<4x512xf32, #tpu.memory_space<vmem>>, vector<4x512xf32>
    %4 = vector.broadcast %0 : f32 to vector<4x512xf32>
    %5 = arith.subf %3, %4 : vector<4x512xf32>
    %6 = vector.broadcast %1 : f32 to vector<4x512xf32>
    %7 = arith.mulf %6, %5 : vector<4x512xf32>
    %8 = arith.mulf %7, %5 : vector<4x512xf32>
    %9 = math.exp %8 : vector<4x512xf32>
    %10 = vector.broadcast %2 : f32 to vector<4x512xf32>
    %11 = arith.mulf %10, %9 : vector<4x512xf32>
    %c0_2 = arith.constant 0 : index
    %c0_3 = arith.constant 0 : index
    %12 = vector.load %arg3[%c0_2, %c0_3] : memref<4x512xf32, #tpu.memory_space<vmem>>, vector<4x512xf32>
    tpu.vector_store %arg3[%c0_2, %c0_3], %11 {strides = array<i32>} : memref<4x512xf32, #tpu.memory_space<vmem>>, vector<4x512xf32>,
    return
  }
  func.func @transform_0(%arg0: i32) -> i32 {
    %c0_i32 = arith.constant 0 : i32
    %c0_i32_0 = arith.constant 0 : i32
    return %c0_i32 : i32
  }
  func.func @transform_1(%arg0: i32) -> (i32, i32) {
    %c0_i32 = arith.constant 0 : i32
    %c0_i32_0 = arith.constant 0 : i32
    return %arg0, %c0_i32 : i32, i32
  }
  func.func @transform_2(%arg0: i32) -> (i32, i32) {
    %c0_i32 = arith.constant 0 : i32
    %c0_i32_0 = arith.constant 0 : i32
    return %arg0, %c0_i32 : i32, i32
  }
}

</mosaic_0001>

<llo_original>
// kernel: tpu_custom_call.1
$region0: #{tpu_custom_call.1}
  #allocation0 [shape = 'u32[]', space=smem, size = 0x4, offset = 0x4, fixed_abs, tag = 'smem constant byte address 0x4 - core index']
  #allocation1 [shape = 'u32[72,128]{1,0:T(1,128)}', space=vmem, size = 0x9000, scoped, tag = 'internal scratch']
  %s0 = inlined_call_operand.hbm [shape: f32[3], index: 0, kind: input, shape index: {}]
  %s1 = inlined_call_operand.hbm [shape: f32[4,512], index: 1, kind: input, shape index: {}]
  %s2 = inlined_call_operand.hbm [shape: f32[4,512], index: 2, kind: output, shape index: {}]
  %s3 = sld [smem:[#allocation0]]
  $region26: #{tpu_custom_call.1} parent=0
    _
  %s5 = ssub.s32 1, %s3
  %s6 = scalar_select 0, %s5, %s3
  $region1: #{tpu_custom_call.1} parent=0
    #allocation2 [shape = 'u8[512]{0}', space=smem, size = 0x200, scoped, tag = 'input window, operand 0, single buffered']
    #allocation3 [shape = 's32[1]{0}', space=sflag, size = 0x4, scoped, tag = 'scoped memory for tpu_custom_call.1']
    #allocation4 [shape = 's32[1]{0}', space=sflag, size = 0x4, scoped, tag = 'scoped memory for tpu_custom_call.1']
    #allocation5 [shape = 's32[1]{0}', space=sflag, size = 0x4, scoped, tag = 'scoped memory for tpu_custom_call.1']
    #allocation6 [shape = 'u8[8192]{0}', space=vmem, size = 0x2000, scoped, tag = 'input window, operand 1, single buffered']
    #allocation7 [shape = 'u8[8192]{0}', space=vmem, size = 0x2000, scoped, tag = 'output window, operand 0, single buffered']
    %7 = vsyncpa [#allocation5], 0
    %8 = vsyncpa [#allocation3], 0
    %9 = vsyncpa [#allocation4], 0
    // Predicated region
    $region2: #{tpu_custom_call.1} parent=1 // pred_check
      _
    $region3: #{tpu_custom_call.1} parent=1 // pred_check_branch
      %11 = sbr.rel (0) target = $region5
    $region4: #{tpu_custom_call.1} parent=1 // pred_region
      %13 = vsyncadd [#allocation5], 0
      %s15 = sshll.u32 %s0, 4
      %s16 = int_to_ptr.hbm [resolvable:$true] %s15
      %18 = dma.hbm_to_smem %s16, 16, [#allocation2], [#allocation5]
    $region5: #{tpu_custom_call.1} parent=1 // pred_fallthru
      _
    // Predicated region
    $region6: #{tpu_custom_call.1} parent=1 // pred_check
      _
    $region7: #{tpu_custom_call.1} parent=1 // pred_check_branch
      %20 = sbr.rel (0) target = $region9
    $region8: #{tpu_custom_call.1} parent=1 // pred_region
      %22 = vsyncadd [#allocation3], 0
      %s24 = sshll.u32 %s1, 4
      %s25 = int_to_ptr.hbm [resolvable:$true] %s24
      %s26 = sshll.u32 [#allocation6], 4
      %s27 = int_to_ptr.vmem [resolvable:$true] %s26
      %29 = dma.hbm_to_vmem [thread:$0]  %s25, 256, %s27, [#allocation3]
    $region9: #{tpu_custom_call.1} parent=1 // pred_fallthru
      _
    // Predicated region
    $region10: #{tpu_custom_call.1} parent=1 // pred_check
      _
    $region11: #{tpu_custom_call.1} parent=1 // pred_check_branch
      %31 = sbr.rel (0) target = $region13
    $region12: #{tpu_custom_call.1} parent=1 // pred_region
      %33 = dma.done [#allocation5], 16
    $region13: #{tpu_custom_call.1} parent=1 // pred_fallthru
      _
    // Predicated region
    $region14: #{tpu_custom_call.1} parent=1 // pred_check
      _
    $region15: #{tpu_custom_call.1} parent=1 // pred_check_branch
      %35 = sbr.rel (0) target = $region17
    $region16: #{tpu_custom_call.1} parent=1 // pred_region
      %37 = dma.done [#allocation3], 256
    $region17: #{tpu_custom_call.1} parent=1 // pred_fallthru
      _
    %38 = sfence
    %s39 = sld [smem:[#allocation2]]
    %s40 = sld [smem:[#allocation2 + $0x1]]
    %s41 = sld [smem:[#allocation2 + $0x2]]
    %v42 = vld [vmem:[#allocation6] sm:$0xff]
    %v43 = vld [vmem:[#allocation6 + $0x8] sm:$0xff]
    %v44 = vstv %s39
    %v45 = vsub.f32 %v42, %v44
    %v46 = vsub.f32 %v43, %v44
    %v47 = vstv %s40
    %v48 = vmul.f32 %v47, %v45
    %v49 = vmul.f32 %v47, %v46
    %v50 = vmul.f32 %v48, %v45
    %v51 = vmul.f32 %v49, %v46
    %v52 = vmul.f32 %v50, 1.442695
    %v53 = vpow.pop %v52
    %v54 = vmul.f32 %v51, 1.442695
    %v55 = vpow.pop %v54
    %v56 = vstv %s41
    %v57 = vmul.f32 %v56, %v53
    %v58 = vmul.f32 %v56, %v55
    %59 = vst [vmem:[#allocation7] sm:$0xff] %v57
    %60 = vst [vmem:[#allocation7 + $0x8] sm:$0xff] %v58
    // Predicated region
    $region18: #{tpu_custom_call.1} parent=1 // pred_check
      _
    $region19: #{tpu_custom_call.1} parent=1 // pred_check_branch
      %62 = sbr.rel (0) target = $region21
    $region20: #{tpu_custom_call.1} parent=1 // pred_region
      %64 = vsyncadd [#allocation4], 0
      %s66 = sshll.u32 [#allocation7], 4
      %s67 = int_to_ptr.vmem [resolvable:$true] %s66
      %s68 = sshll.u32 %s2, 4
      %s69 = int_to_ptr.hbm [resolvable:$true] %s68
      %71 = dma.vmem_to_hbm [thread:$0]  %s67, 256, %s69, [#allocation4]
    $region21: #{tpu_custom_call.1} parent=1 // pred_fallthru
      _
    // Predicated region
    $region22: #{tpu_custom_call.1} parent=1 // pred_check
      _
    $region23: #{tpu_custom_call.1} parent=1 // pred_check_branch
      %73 = sbr.rel (0) target = $region25
    $region24: #{tpu_custom_call.1} parent=1 // pred_region
      %75 = dma.done [#allocation4], 256
    $region25: #{tpu_custom_call.1} parent=1 // pred_fallthru
      _
    %76 = vsyncpa [#allocation3], 1
    %77 = vsyncpa [#allocation4], 1
    %78 = vsyncpa [#allocation5], 1

</llo_original>
